<compile_context>
chip_gen: v6e
topology: v6e:2x2x1
jax: 0.10.0
libtpu: 0.0.40
codegen_flags: <defaults>
</compile_context>

<pallas_src>
import functools

import jax
import jax.numpy as jnp
from jax.experimental import pallas as pl
from jax.experimental.pallas import tpu as pltpu

_LANE = 128
# Explicit scoped-VMEM budget: safe on v5e/v6e (128 MiB physical) and v7x (64 MiB).
_VMEM_LIMIT_BYTES = 48 * 1024 * 1024


def _conv_stats_kernel(x_ref, w_ref, y_ref, psum_ref, psumsq_ref, *,
                       k_taps, l_out, l_out_al):
    """Conv1d (stride 1) as K shifted matmuls + per-channel sum / sum-of-squares.

    x_ref     : (1, C_in, L_work)     bf16/f32  one zero-padded batch row
    w_ref     : (K, C_out, C_in)      bf16/f32  conv weight, tap-major
    y_ref     : (1, C_out, L_out_al)  f32       conv output (lane padded, masked)
    psum_ref  : (1, C_out, 1)         f32       sum_l y[c, l]   (valid lanes only)
    psumsq_ref: (1, C_out, 1)         f32       sum_l y[c, l]^2 (valid lanes only)
    """
    # y[co, l] = sum_d W_d[co, :] @ x[:, l + d]   (stride 1, static tap offsets)
    y = jnp.dot(w_ref[0], x_ref[0, :, pl.ds(0, l_out_al)],
                preferred_element_type=jnp.float32)
    for d in range(1, k_taps):
        y = y + jnp.dot(w_ref[d], x_ref[0, :, pl.ds(d, l_out_al)],
                        preferred_element_type=jnp.float32)

    # Zero the lanes beyond the true L_out so they do not pollute the BN stats
    # (the last K-1 spurious lanes can see real input data).
    if l_out < l_out_al:
        lane = jax.lax.broadcasted_iota(jnp.int32, y.shape, 1)
        y = jnp.where(lane < l_out, y, 0.0)

    y_ref[0] = y
    # Single-pass BatchNorm statistics (per output channel), f32.
    psum_ref[0] = jnp.sum(y, axis=1, keepdims=True)
    psumsq_ref[0] = jnp.sum(y * y, axis=1, keepdims=True)


def _bn_relu_kernel(y_ref, scale_ref, shift_ref, o_ref):
    """Folded BatchNorm affine + ReLU (Dropout p=0.0 is the identity)."""
    o_ref[0] = jnp.maximum(y_ref[0] * scale_ref[...] + shift_ref[...], 0.0)


def cnn_block_forward(x, weight, bias, gamma, beta, *, stride=1, padding=0,
                      eps=1e-5, dropout_p=0.0, compute_dtype=jnp.bfloat16):
    """x: (N, C_in, L) f32; weight: (C_out, C_in, K); bias/gamma/beta: (C_out,)."""
    # Per-channel conv bias is mathematically cancelled by train-mode BN's mean
    # subtraction: (y + b) - mean(y + b) == y - mean(y).  Kept only for API parity.
    del bias

    if dropout_p != 0.0:
        # TODO(synk): Dropout with p>0 (stateful RNG mask via pltpu.prng_*) not implemented;
        # the module default / instantiation uses p=0.0 (identity).
        raise NotImplementedError("dropout_p > 0 not supported")
    if stride != 1:
        # TODO(synk): stride>1 would need strided per-tap lane slices; module default is stride=1.
        raise NotImplementedError("stride != 1 not supported")

    n, c_in, length = x.shape
    c_out, _, k = weight.shape
    l_out = (length + 2 * padding - k) // stride + 1
    l_out_al = max(_LANE, -(-l_out // _LANE) * _LANE)   # lane-dense output width
    l_work = l_out_al + k - 1                           # input window needed (stride 1)

    # Pad once (conv left-padding + zero extension to the aligned window on the right)
    # and cast the matmul operands to bf16; accumulation and BN math stay f32.
    x_work = jnp.pad(
        x, ((0, 0), (0, 0), (padding, l_work - length - padding))
    ).astype(compute_dtype)
    w_taps = jnp.transpose(weight, (2, 0, 1)).astype(compute_dtype)   # (K, C_out, C_in)

    cparams = pltpu.CompilerParams(
        dimension_semantics=("parallel",),      # batch rows are independent -> megacore on v7x
        vmem_limit_bytes=_VMEM_LIMIT_BYTES)

    conv_kernel = functools.partial(
        _conv_stats_kernel, k_taps=k, l_out=l_out, l_out_al=l_out_al)

    # ---- phase 1: conv + per-row partial BN stats -----------------------------
    # NOTE: for very long L, add a second (L-tile) grid axis with a K-1 halo; at
    # these sizes one lane-aligned tile per batch row fits VMEM comfortably.
    y_conv, psum, psumsq = pl.pallas_call(
        conv_kernel,
        out_shape=(
            jax.ShapeDtypeStruct((n, c_out, l_out_al), jnp.float32),
            jax.ShapeDtypeStruct((n, c_out, 1), jnp.float32),
            jax.ShapeDtypeStruct((n, c_out, 1), jnp.float32),
        ),
        grid=(n,),
        in_specs=[
            pl.BlockSpec((1, c_in, l_work), lambda i: (i, 0, 0)),
            pl.BlockSpec((k, c_out, c_in), lambda i: (0, 0, 0)),
        ],
        out_specs=(
            pl.BlockSpec((1, c_out, l_out_al), lambda i: (i, 0, 0)),
            pl.BlockSpec((1, c_out, 1), lambda i: (i, 0, 0)),
            pl.BlockSpec((1, c_out, 1), lambda i: (i, 0, 0)),
        ),
        compiler_params=cparams,
    )(x_work, w_taps)

    # ---- tiny glue: fold train-mode BN into one per-channel affine ------------
    m_true = float(n * l_out)                           # true element count (padded lanes are zero)
    s = jnp.sum(psum[:, :, 0], axis=0)                  # (C_out,)
    ss = jnp.sum(psumsq[:, :, 0], axis=0)               # (C_out,)
    mean = s / m_true
    var = jnp.maximum(ss / m_true - mean * mean, 0.0)   # biased variance (PyTorch train mode)
    scale = gamma * jax.lax.rsqrt(var + eps)
    shift = beta - mean * scale

    # ---- phase 2: apply affine + ReLU, lane-dense stores -----------------------
    out_full = pl.pallas_call(
        _bn_relu_kernel,
        out_shape=jax.ShapeDtypeStruct((n, c_out, l_out_al), jnp.float32),
        grid=(n,),
        in_specs=[
            pl.BlockSpec((1, c_out, l_out_al), lambda i: (i, 0, 0)),
            pl.BlockSpec((c_out, 1), lambda i: (0, 0)),
            pl.BlockSpec((c_out, 1), lambda i: (0, 0)),
        ],
        out_specs=pl.BlockSpec((1, c_out, l_out_al), lambda i: (i, 0, 0)),
        compiler_params=cparams,
    )(y_conv, scale.reshape(c_out, 1), shift.reshape(c_out, 1))

    # Already in (N, C_out, L) layout -> just drop the lane padding.
    return out_full[:, :, :l_out]


def _reference(x, weight, bias, gamma, beta, *, stride, padding, eps=1e-5):
    """Pure-JAX f32 reference (conv1d + bias + train-mode BN + ReLU)."""
    y = jax.lax.conv_general_dilated(
        x, weight, window_strides=(stride,), padding=[(padding, padding)],
        dimension_numbers=("NCH", "OIH", "NCH"))
    y = y + bias[None, :, None]
    mean = jnp.mean(y, axis=(0, 2), keepdims=True)
    var = jnp.mean((y - mean) ** 2, axis=(0, 2), keepdims=True)
    y = (y - mean) / jnp.sqrt(var + eps)
    y = y * gamma[None, :, None] + beta[None, :, None]
    return jnp.maximum(y, 0.0)


if __name__ == "__main__":
    # Module config: cnn_block(in_channels=4, out_channels=8, kernel_size=3,
    #                          stride=1, padding=1, dropout=0.0)
    N, C_IN, L = 2, 4, 16
    C_OUT, K, STRIDE, PAD = 8, 3, 1, 1

    key = jax.random.PRNGKey(0)
    kx, kw, kb = jax.random.split(key, 3)

    x = jax.random.normal(kx, (N, C_IN, L), dtype=jnp.float32)
    weight = jax.random.normal(kw, (C_OUT, C_IN, K), dtype=jnp.float32) * 0.1
    bias = jax.random.normal(kb, (C_OUT,), dtype=jnp.float32) * 0.1   # cancels under train-mode BN
    gamma = jnp.ones((C_OUT,), dtype=jnp.float32)    # BN weight
    beta = jnp.zeros((C_OUT,), dtype=jnp.float32)    # BN bias

    ref = _reference(x, weight, bias, gamma, beta, stride=STRIDE, padding=PAD)

    # Default (bf16 MXU) path.
    out = cnn_block_forward(x, weight, bias, gamma, beta, stride=STRIDE, padding=PAD)
    out = jax.block_until_ready(out)
    assert out.shape == (N, C_OUT, L)
    # bf16 matmul operands -> ~0.4% relative rounding on the conv; BN math is f32.
    assert jnp.allclose(out, ref, atol=5e-2, rtol=5e-2)

    # f32 path for a tight structural-correctness check (same kernels, f32 operands).
    out_f32 = cnn_block_forward(x, weight, bias, gamma, beta, stride=STRIDE,
                                padding=PAD, compute_dtype=jnp.float32)
    out_f32 = jax.block_until_ready(out_f32)
    assert jnp.allclose(out_f32, ref, atol=1e-4, rtol=1e-4)

    print("KERNEL_OK")
</pallas_src>

<mosaic_0001>
module attributes {stable_mosaic.version = 11 : i64} {
  func.func @_conv_stats_kernel(%arg0: i32, %arg1: memref<1x4x130xbf16, #tpu.memory_space<vmem>>, %arg2: memref<3x8x4xbf16, #tpu.memory_space<vmem>>, %arg3: memref<1x8x128xf32, #tpu.memory_space<vmem>>, %arg4: memref<1x8x1xf32, #tpu.memory_space<vmem>>, %arg5: memref<1x8x1xf32, #tpu.memory_space<vmem>>) attributes {dimension_semantics = [#tpu.dimension_semantics<parallel>], iteration_bounds = array<i64: 2>, scalar_prefetch = 0 : i64, scratch_operands = 0 : i64, tpu.core_type = #tpu.core_type<tc>, window_params = [{transform_indices = @transform_0, window_bounds = array<i64: 1, 4, 130>}, {pipeline_mode = #tpu.pipeline_mode<synchronous>, transform_indices = @transform_1, window_bounds = array<i64: 3, 8, 4>}, {transform_indices = @transform_2, window_bounds = array<i64: 1, 8, 128>}, {transform_indices = @transform_3, window_bounds = array<i64: 1, 8, 1>}, {transform_indices = @transform_4, window_bounds = array<i64: 1, 8, 1>}]} {
    %c0 = arith.constant 0 : index
    %c0_0 = arith.constant 0 : index
    %c0_1 = arith.constant 0 : index
    %0 = vector.load %arg2[%c0, %c0_0, %c0_1] : memref<3x8x4xbf16, #tpu.memory_space<vmem>>, vector<1x8x4xbf16>
    %1 = vector.shape_cast %0 : vector<1x8x4xbf16> to vector<8x4xbf16>
    %c0_2 = arith.constant 0 : index
    %c0_3 = arith.constant 0 : index
    %c0_4 = arith.constant 0 : index
    %2 = vector.load %arg1[%c0_2, %c0_3, %c0_4] : memref<1x4x130xbf16, #tpu.memory_space<vmem>>, vector<1x4x128xbf16>
    %3 = vector.shape_cast %2 : vector<1x4x128xbf16> to vector<4x128xbf16>
    %cst = arith.constant dense<0.000000e+00> : vector<8x128xf32>
    %4 = tpu.matmul %1, %3, %cst {dimension_numbers = #tpu.dot_dimension_numbers<[1], [0], [0], [1], [0, 0, 1, 1], [], []>} : vector<8x4xbf16>, vector<4x128xbf16>, vector<8x128xf32> -> vector<8x128xf32>
    %c1 = arith.constant 1 : index
    %c0_5 = arith.constant 0 : index
    %c0_6 = arith.constant 0 : index
    %5 = vector.load %arg2[%c1, %c0_5, %c0_6] : memref<3x8x4xbf16, #tpu.memory_space<vmem>>, vector<1x8x4xbf16>
    %6 = vector.shape_cast %5 : vector<1x8x4xbf16> to vector<8x4xbf16>
    %c0_7 = arith.constant 0 : index
    %c0_8 = arith.constant 0 : index
    %c1_9 = arith.constant 1 : index
    %7 = vector.load %arg1[%c0_7, %c0_8, %c1_9] : memref<1x4x130xbf16, #tpu.memory_space<vmem>>, vector<1x4x128xbf16>
    %8 = vector.shape_cast %7 : vector<1x4x128xbf16> to vector<4x128xbf16>
    %cst_10 = arith.constant dense<0.000000e+00> : vector<8x128xf32>
    %9 = tpu.matmul %6, %8, %cst_10 {dimension_numbers = #tpu.dot_dimension_numbers<[1], [0], [0], [1], [0, 0, 1, 1], [], []>} : vector<8x4xbf16>, vector<4x128xbf16>, vector<8x128xf32> -> vector<8x128xf32>
    %10 = arith.addf %4, %9 : vector<8x128xf32>
    %c2 = arith.constant 2 : index
    %c0_11 = arith.constant 0 : index
    %c0_12 = arith.constant 0 : index
    %11 = vector.load %arg2[%c2, %c0_11, %c0_12] : memref<3x8x4xbf16, #tpu.memory_space<vmem>>, vector<1x8x4xbf16>
    %12 = vector.shape_cast %11 : vector<1x8x4xbf16> to vector<8x4xbf16>
    %c0_13 = arith.constant 0 : index
    %c0_14 = arith.constant 0 : index
    %c2_15 = arith.constant 2 : index
    %13 = vector.load %arg1[%c0_13, %c0_14, %c2_15] : memref<1x4x130xbf16, #tpu.memory_space<vmem>>, vector<1x4x128xbf16>
    %14 = vector.shape_cast %13 : vector<1x4x128xbf16> to vector<4x128xbf16>
    %cst_16 = arith.constant dense<0.000000e+00> : vector<8x128xf32>
    %15 = tpu.matmul %12, %14, %cst_16 {dimension_numbers = #tpu.dot_dimension_numbers<[1], [0], [0], [1], [0, 0, 1, 1], [], []>} : vector<8x4xbf16>, vector<4x128xbf16>, vector<8x128xf32> -> vector<8x128xf32>
    %16 = arith.addf %10, %15 : vector<8x128xf32>
    %17 = tpu.iota {dimensions = array<i32: 1>} : vector<8x128xi32>
    %c16_i32 = arith.constant 16 : i32
    %18 = vector.broadcast %c16_i32 : i32 to vector<8x128xi32>
    %19 = arith.cmpi slt, %17, %18 : vector<8x128xi32>
    %cst_17 = arith.constant 0.000000e+00 : f32
    %20 = vector.broadcast %cst_17 : f32 to vector<8x128xf32>
    %21 = arith.select %19, %16, %20 : vector<8x128xi1>, vector<8x128xf32>
    %c0_18 = arith.constant 0 : index
    %c0_19 = arith.constant 0 : index
    %c0_20 = arith.constant 0 : index
    %22 = vector.load %arg3[%c0_18, %c0_19, %c0_20] : memref<1x8x128xf32, #tpu.memory_space<vmem>>, vector<1x8x128xf32>
    %23 = vector.shape_cast %22 : vector<1x8x128xf32> to vector<8x128xf32>
    %24 = vector.shape_cast %21 : vector<8x128xf32> to vector<1x8x128xf32>
    tpu.vector_store %arg3[%c0_18, %c0_19, %c0_20], %24 {strides = array<i32>} : memref<1x8x128xf32, #tpu.memory_space<vmem>>, vector<1x8x128xf32>,
    %cst_21 = arith.constant dense<0.000000e+00> : vector<8xf32>
    %25 = vector.multi_reduction <add>, %21, %cst_21 [1] : vector<8x128xf32> to vector<8xf32>
    %26 = vector.shape_cast %25 : vector<8xf32> to vector<8x1xf32>
    %c0_22 = arith.constant 0 : index
    %c0_23 = arith.constant 0 : index
    %c0_24 = arith.constant 0 : index
    %27 = vector.load %arg4[%c0_22, %c0_23, %c0_24] : memref<1x8x1xf32, #tpu.memory_space<vmem>>, vector<1x8x1xf32>
    %28 = vector.shape_cast %27 : vector<1x8x1xf32> to vector<8x1xf32>
    %29 = vector.shape_cast %26 : vector<8x1xf32> to vector<1x8x1xf32>
    tpu.vector_store %arg4[%c0_22, %c0_23, %c0_24], %29 {strides = array<i32>} : memref<1x8x1xf32, #tpu.memory_space<vmem>>, vector<1x8x1xf32>,
    %30 = arith.mulf %21, %21 : vector<8x128xf32>
    %cst_25 = arith.constant dense<0.000000e+00> : vector<8xf32>
    %31 = vector.multi_reduction <add>, %30, %cst_25 [1] : vector<8x128xf32> to vector<8xf32>
    %32 = vector.shape_cast %31 : vector<8xf32> to vector<8x1xf32>
    %c0_26 = arith.constant 0 : index
    %c0_27 = arith.constant 0 : index
    %c0_28 = arith.constant 0 : index
    %33 = vector.load %arg5[%c0_26, %c0_27, %c0_28] : memref<1x8x1xf32, #tpu.memory_space<vmem>>, vector<1x8x1xf32>
    %34 = vector.shape_cast %33 : vector<1x8x1xf32> to vector<8x1xf32>
    %35 = vector.shape_cast %32 : vector<8x1xf32> to vector<1x8x1xf32>
    tpu.vector_store %arg5[%c0_26, %c0_27, %c0_28], %35 {strides = array<i32>} : memref<1x8x1xf32, #tpu.memory_space<vmem>>, vector<1x8x1xf32>,
    return
  }
  func.func @transform_0(%arg0: i32) -> (i32, i32, i32) {
    %c0_i32 = arith.constant 0 : i32
    %c0_i32_0 = arith.constant 0 : i32
    %c0_i32_1 = arith.constant 0 : i32
    return %arg0, %c0_i32, %c0_i32_0 : i32, i32, i32
  }
  func.func @transform_1(%arg0: i32) -> (i32, i32, i32) {
    %c0_i32 = arith.constant 0 : i32
    %c0_i32_0 = arith.constant 0 : i32
    %c0_i32_1 = arith.constant 0 : i32
    %c0_i32_2 = arith.constant 0 : i32
    return %c0_i32, %c0_i32_0, %c0_i32_1 : i32, i32, i32
  }
  func.func @transform_2(%arg0: i32) -> (i32, i32, i32) {
    %c0_i32 = arith.constant 0 : i32
    %c0_i32_0 = arith.constant 0 : i32
    %c0_i32_1 = arith.constant 0 : i32
    return %arg0, %c0_i32, %c0_i32_0 : i32, i32, i32
  }
  func.func @transform_3(%arg0: i32) -> (i32, i32, i32) {
    %c0_i32 = arith.constant 0 : i32
    %c0_i32_0 = arith.constant 0 : i32
    %c0_i32_1 = arith.constant 0 : i32
    return %arg0, %c0_i32, %c0_i32_0 : i32, i32, i32
  }
  func.func @transform_4(%arg0: i32) -> (i32, i32, i32) {
    %c0_i32 = arith.constant 0 : i32
    %c0_i32_0 = arith.constant 0 : i32
    %c0_i32_1 = arith.constant 0 : i32
    return %arg0, %c0_i32, %c0_i32_0 : i32, i32, i32
  }
}

</mosaic_0001>

<llo_original>
// kernel: tpu_custom_call.1
$region0: #{tpu_custom_call.1}
  #allocation0 [shape = 'u32[]', space=smem, size = 0x4, offset = 0x4, fixed_abs, tag = 'smem constant byte address 0x4 - core index']
  #allocation1 [shape = 'u32[144,128]{1,0:T(1,128)}', space=vmem, size = 0x12000, scoped, tag = 'internal scratch']
  %s0 = inlined_call_operand.vmem [shape: bf16[2,4,130], index: 0, kind: input, shape index: {}]
  %s1 = inlined_call_operand.vmem [shape: bf16[3,8,4], index: 1, kind: input, shape index: {}]
  %s2 = inlined_call_operand.hbm [shape: f32[2,8,128], index: 2, kind: output, shape index: {0}]
  %s3 = inlined_call_operand.vmem [shape: f32[2,8,1], index: 3, kind: output, shape index: {1}]
  %s4 = inlined_call_operand.vmem [shape: f32[2,8,1], index: 4, kind: output, shape index: {2}]
  %5 = xla_tuple %s2, %s3, %s4
  %s6 = sld [smem:[#allocation0]]
  $region57: #{tpu_custom_call.1} parent=0
    _
  %s8 = ssub.s32 1, %s6
  %s9 = scalar_select 0, %s8, %s6
  $region1: #{tpu_custom_call.1} parent=0
    #allocation2 [shape = 'u8[8192]{0}', space=vmem, size = 0x2000, scoped, tag = 'output window, operand 0']
    #allocation3 [shape = 's32[2]{0}', space=sflag, size = 0x8, scoped, tag = 'scoped memory for tpu_custom_call.1']
    %10 = vsyncpa [#allocation3], 0
    %s11 = scalar_lea.sflag [#allocation3], 1
    %12 = vsyncpa %s11, 0
    loop: start=0, step=1, limit=4
    $region2: #{tpu_custom_call.1} parent=1 // loop_pre_header
      _
    $region3: #{tpu_custom_call.1} parent=1 // loop_header
      %s14 = sphi 0, %s18
      %p15 = scmp.ge.s32.totalorder %s14, 4
      %s24 = sphi 0, %s26
      %s27 = sphi 0, %s24
      %s28 = sphi 0, %s27
      %s44 = sphi 0, %s28
      %s48 = sphi 0, %s48
      %s50 = sphi 0, %s48
      %s51 = sphi 0, %s50
      %s65 = sphi 0, %s51
      %s71 = sphi 0, %s73
      %s74 = sphi 0, %s71
      %s75 = sphi 0, %s74
      %s91 = sphi 0, %s75
      %s97 = sphi 0, %s99
      %s100 = sphi 0, %s97
      %s101 = sphi 0, %s100
      %s117 = sphi 0, %s101
      %s123 = sphi 0, %s125
      %s126 = sphi 0, %s123
      %s127 = sphi 0, %s126
      %s143 = sphi 0, %s127
    $region4: #{tpu_custom_call.1} parent=1 // loop_header_branch
      %17 = sbr.rel (%p15) target = $region8
    $region5: #{tpu_custom_call.1} parent=1 // loop_body
      %s19 = ssub.s32 %s14, 1
      %s20 = ssub.s32 %s14, 2
      %s21 = sadd.s32 %s14, 1
      %s22 = ssub.s32 %s14, %s21
      %p23 = scmp.eq.s32.totalorder %s22, 0
      %s25 = sadd.s32 %s24, 1
      %s26 = scalar_select %p23, %s24, %s25
      %p29 = pneg %p23
      %p30 = scmp.eq.s32.totalorder %s14, 1
      %p31 = por %p29, %p30
      %p32 = scmp.ne.s32.totalorder %s24, %s27
      %p33 = scmp.eq.s32.totalorder %s14, 0
      %p34 = por %p32, %p33
      %p35 = scmp.ne.s32.totalorder %s24, %s27
      %p36 = scmp.eq.s32.totalorder %s19, 1
      %p37 = por %p35, %p36
      %p38 = scmp.ne.s32.totalorder %s27, %s28
      %p39 = scmp.eq.s32.totalorder %s19, 0
      %p40 = por %p38, %p39
      %p41 = scmp.ne.s32.totalorder %s27, %s28
      %p42 = scmp.eq.s32.totalorder %s20, 1
      %p43 = por %p41, %p42
      %p45 = scmp.ne.s32.totalorder %s28, %s44
      %p46 = scmp.eq.s32.totalorder %s20, 0
      %p47 = por %p45, %p46
      %s49 = sadd.s32 %s48, 1
      %p52 = scmp.eq.s32.totalorder %s14, 1
      %p53 = scmp.ne.s32.totalorder %s48, %s50
      %p54 = scmp.eq.s32.totalorder %s14, 0
      %p55 = por %p53, %p54
      %p56 = scmp.ne.s32.totalorder %s48, %s50
      %p57 = scmp.eq.s32.totalorder %s19, 1
      %p58 = por %p56, %p57
      %p59 = scmp.ne.s32.totalorder %s50, %s51
      %p60 = scmp.eq.s32.totalorder %s19, 0
      %p61 = por %p59, %p60
      %p62 = scmp.ne.s32.totalorder %s50, %s51
      %p63 = scmp.eq.s32.totalorder %s20, 1
      %p64 = por %p62, %p63
      %p66 = scmp.ne.s32.totalorder %s51, %s65
      %p67 = scmp.eq.s32.totalorder %s20, 0
      %p68 = por %p66, %p67
      %s69 = ssub.s32 %s14, %s21
      %p70 = scmp.eq.s32.totalorder %s69, 0
      %s72 = sadd.s32 %s71, 1
      %s73 = scalar_select %p70, %s71, %s72
      %p76 = pneg %p70
      %p77 = scmp.eq.s32.totalorder %s14, 1
      %p78 = por %p76, %p77
      %p79 = scmp.ne.s32.totalorder %s71, %s74
      %p80 = scmp.eq.s32.totalorder %s14, 0
      %p81 = por %p79, %p80
      %p82 = scmp.ne.s32.totalorder %s71, %s74
      %p83 = scmp.eq.s32.totalorder %s19, 1
      %p84 = por %p82, %p83
      %p85 = scmp.ne.s32.totalorder %s74, %s75
      %p86 = scmp.eq.s32.totalorder %s19, 0
      %p87 = por %p85, %p86
      %p88 = scmp.ne.s32.totalorder %s74, %s75
      %p89 = scmp.eq.s32.totalorder %s20, 1
      %p90 = por %p88, %p89
      %p92 = scmp.ne.s32.totalorder %s75, %s91
      %p93 = scmp.eq.s32.totalorder %s20, 0
      %p94 = por %p92, %p93
      %s95 = ssub.s32 %s14, %s21
      %p96 = scmp.eq.s32.totalorder %s95, 0
      %s98 = sadd.s32 %s97, 1
      %s99 = scalar_select %p96, %s97, %s98
      %p102 = pneg %p96
      %p103 = scmp.eq.s32.totalorder %s14, 1
      %p104 = por %p102, %p103
      %p105 = scmp.ne.s32.totalorder %s97, %s100
      %p106 = scmp.eq.s32.totalorder %s14, 0
      %p107 = por %p105, %p106
      %p108 = scmp.ne.s32.totalorder %s97, %s100
      %p109 = scmp.eq.s32.totalorder %s19, 1
      %p110 = por %p108, %p109
      %p111 = scmp.ne.s32.totalorder %s100, %s101
      %p112 = scmp.eq.s32.totalorder %s19, 0
      %p113 = por %p111, %p112
      %p114 = scmp.ne.s32.totalorder %s100, %s101
      %p115 = scmp.eq.s32.totalorder %s20, 1
      %p116 = por %p114, %p115
      %p118 = scmp.ne.s32.totalorder %s101, %s117
      %p119 = scmp.eq.s32.totalorder %s20, 0
      %p120 = por %p118, %p119
      %s121 = ssub.s32 %s14, %s21
      %p122 = scmp.eq.s32.totalorder %s121, 0
      %s124 = sadd.s32 %s123, 1
      %s125 = scalar_select %p122, %s123, %s124
      %p128 = pneg %p122
      %p129 = scmp.eq.s32.totalorder %s14, 1
      %p130 = por %p128, %p129
      %p131 = scmp.ne.s32.totalorder %s123, %s126
      %p132 = scmp.eq.s32.totalorder %s14, 0
      %p133 = por %p131, %p132
      %p134 = scmp.ne.s32.totalorder %s123, %s126
      %p135 = scmp.eq.s32.totalorder %s19, 1
      %p136 = por %p134, %p135
      %p137 = scmp.ne.s32.totalorder %s126, %s127
      %p138 = scmp.eq.s32.totalorder %s19, 0
      %p139 = por %p137, %p138
      %p140 = scmp.ne.s32.totalorder %s126, %s127
      %p141 = scmp.eq.s32.totalorder %s20, 1
      %p142 = por %p140, %p141
      %p144 = scmp.ne.s32.totalorder %s127, %s143
      %p145 = scmp.eq.s32.totalorder %s20, 0
      %p146 = por %p144, %p145
      %p147 = scmp.le.s32.totalorder 1, %s14
      %p148 = scmp.lt.s32.totalorder %s14, 3
      %p149 = pnand %p147, %p148
      %p150 = pneg %p149
      // Predicated region
      $region9: #{tpu_custom_call.1} parent=5 // pred_check
        _
      $region10: #{tpu_custom_call.1} parent=5 // pred_check_branch
        %152 = sbr.rel (%p149) target = $region12
      $region11: #{tpu_custom_call.1} parent=5 // pred_region
        %s153 = ssub.s32 %s14, 1
        // Predicated region
        $region13: #{tpu_custom_call.1} parent=11 // pred_check
          %p154 = pneg %p61
        $region14: #{tpu_custom_call.1} parent=11 // pred_check_branch
          %156 = sbr.rel (%p154) target = $region16
        $region15: #{tpu_custom_call.1} parent=11 // pred_region
          _
        $region16: #{tpu_custom_call.1} parent=11 // pred_fallthru
          _
      $region12: #{tpu_custom_call.1} parent=5 // pred_fallthru
        _
      %p157 = scmp.lt.s32.totalorder %s14, 2
      // Predicated region
      $region17: #{tpu_custom_call.1} parent=5 // pred_check
        %p158 = pneg %p157
      $region18: #{tpu_custom_call.1} parent=5 // pred_check_branch
        %160 = sbr.rel (%p158) target = $region20
      $region19: #{tpu_custom_call.1} parent=5 // pred_region
        // Predicated region
        $region21: #{tpu_custom_call.1} parent=19 // pred_check
          %p161 = pneg %p34
        $region22: #{tpu_custom_call.1} parent=19 // pred_check_branch
          %163 = sbr.rel (%p161) target = $region24
        $region23: #{tpu_custom_call.1} parent=19 // pred_region
          %p164 = scmp.lt.s32.totalorder %s14, 1
          %s165 = scalar_select %p164, %s14, 1
          %s166 = smul.addr %s165, 2
          %s167 = smul.addr %s166, 2
          %s168 = scalar_lea.vmem %s0, %s167
        $region24: #{tpu_custom_call.1} parent=19 // pred_fallthru
          _
      $region20: #{tpu_custom_call.1} parent=5 // pred_fallthru
        _
      %p169 = scmp.le.s32.totalorder 1, %s14
      %p170 = scmp.lt.s32.totalorder %s14, 3
      %p171 = pnand %p169, %p170
      %p172 = pneg %p171
      // Predicated region
      $region25: #{tpu_custom_call.1} parent=5 // pred_check
        _
      $region26: #{tpu_custom_call.1} parent=5 // pred_check_branch
        %174 = sbr.rel (%p171) target = $region28
      $region27: #{tpu_custom_call.1} parent=5 // pred_region
        %s175 = ssub.s32 %s14, 1
        %p176 = scmp.lt.s32.totalorder %s19, 1
        %s177 = scalar_select %p176, %s19, 1
        %s178 = smul.addr %s177, 2
        %s179 = smul.addr %s178, 2
        %s180 = scalar_lea.vmem %s0, %s179
        %p181 = pneg %p40
        %p182 = pneg %p37
        %p183 = pneg %p61
        %p184 = pneg %p58
        %p185 = pneg %p87
        %p186 = pneg %p84
        %s187 = sand.u32 %s74, 1
        %s188 = scalar_lea.sflag [#allocation3], %s187
        %s189 = sand.u32 %s74, 1
        %s190 = smul.addr %s189, 8
        %s191 = scalar_lea.vmem [#allocation2], %s190
        %p192 = pneg %p113
        %p193 = pneg %p110
        %p194 = scmp.lt.s32.totalorder %s19, 1
        %s195 = scalar_select %p194, %s19, 1
        %s196 = smul.addr %s195, 8
        %s197 = scalar_lea.vmem %s3, %s196
        %p198 = pneg %p139
        %p199 = pneg %p136
        %p200 = scmp.lt.s32.totalorder %s19, 1
        %s201 = scalar_select %p200, %s19, 1
        %s202 = smul.addr %s201, 8
        %s203 = scalar_lea.vmem %s4, %s202
        %p204 = scmp.lt.s32.totalorder %s19, 1
        %s205 = scalar_select %p204, %s19, 1
        %s206 = smul.addr %s205, 2
        %s207 = smul.addr %s206, 2
        %s208 = scalar_lea.vmem %s0, %s207
        %p209 = scmp.lt.s32.totalorder %s19, 1
        %s210 = scalar_select %p209, %s19, 1
        %s211 = smul.addr %s210, 8
        %s212 = scalar_lea.vmem %s3, %s211
        %p213 = scmp.lt.s32.totalorder %s19, 1
        %s214 = scalar_select %p213, %s19, 1
        %s215 = smul.addr %s214, 8
        %s216 = scalar_lea.vmem %s4, %s215
        %v218 = vld [vmem:[%s1] sm:$0xf]
        %v219 = vld [vmem:[%s208] sm:$0x3]
        %s220 = scalar_lea.vmem %s1, 4
        %v221 = vld [vmem:[%s220] sm:$0xf]
        %v222 = vld [vmem:[%s208] sm:$0xf]
        %v225 = vunpack.c.l.s4 1983009808
        %v226 = vunpack.c.0.s8 %v225
        %v227 = vlaneseq
        %v228 = vshrl.u32 %v227, 7
        %v229 = vsub.s32 %v226, %v228
        %v230 = vrot.slane %v222, %v229
        %v231 = vcombine.high %v230, %v230
        %232 = vrot.lane.b32.xlu0 %v230, 127
        %v233 = vpop.permute.xlu0 %232
        %234 = vrot.lane.b32.xlu0 %v231, 127
        %v235 = vpop.permute.xlu0 %234
        %vm236 = vcmask 1039360
        %v237 = vsel %vm236, %v233, %v235
        %vm238 = vcmask 31744
        %v240 = vsel %vm238, %v221, 0
        %vm242 = vcmask 1041408
        %v244 = vsel %vm242, %v237, 0
        %246 = vmatprep.subr.bf16.mxu0 0
        %247 = vmatpush1.bf16.msra.mxu0 0
        %248 = vmatprep.subr.bf16.mxu0 0
        %249 = vmatpush1.bf16.msra.mxu0 0
        %250 = vmatprep.subr.bf16.mxu0 0
        %251 = vmatpush1.bf16.msra.mxu0 0
        %252 = vmatprep.subr.bf16.mxu0 0
        %253 = vmatpush1.bf16.msra.mxu0 0
        %254 = vmatprep.subr.bf16.mxu0 0
        %255 = vmatpush1.bf16.msra.mxu0 0
        %256 = vmatprep.subr.bf16.mxu0 0
        %257 = vmatpush1.bf16.msra.mxu0 0
        %258 = vmatprep.subr.bf16.mxu0 0
        %259 = vmatpush1.bf16.msra.mxu0 0
        %260 = vmatprep.subr.bf16.mxu0 0
        %261 = vmatpush1.bf16.msra.mxu0 %v244
        %262 = vmatprep.subr.bf16.mxu0 0
        %263 = vmatpush2.bf16.msra.mxu0 0
        %264 = vmatprep.subr.bf16.mxu0 0
        %265 = vmatpush2.bf16.msra.mxu0 0
        %266 = vmatprep.subr.bf16.mxu0 0
        %267 = vmatpush2.bf16.msra.mxu0 0
        %268 = vmatprep.subr.bf16.mxu0 0
        %269 = vmatpush2.bf16.msra.mxu0 0
        %270 = vmatprep.subr.bf16.mxu0 0
        %271 = vmatpush2.bf16.msra.mxu0 0
        %272 = vmatprep.subr.bf16.mxu0 0
        %273 = vmatpush2.bf16.msra.mxu0 0
        %274 = vmatprep.subr.bf16.mxu0 0
        %275 = vmatpush2.bf16.msra.mxu0 0
        %276 = vmatprep.subr.bf16.mxu0 0
        %277 = vmatpush2.bf16.msra.mxu0 0
        %278 = vmatprep.mubr.bf16.mxu0 0
        %279 = vmatmul.mubr.bf16.gmra.mxu0 %v240
        %v280 = vpop.f32.mrf.mxu0
        %v281 = vadd.f32 0.0, %v280
        %v282 = vpop.f32.mrf.mxu0
        %v283 = vpop.f32.mrf.mxu0
        %v284 = vpop.f32.mrf.mxu0
        %285 = vdwg.mxu0
        %v287 = vsel %vm238, %v218, 0
        %v290 = vsel %vm242, %v219, 0
        %292 = vmatprep.subr.bf16.mxu0 0
        %293 = vmatpush1.bf16.msra.mxu0 0
        %294 = vmatprep.subr.bf16.mxu0 0
        %295 = vmatpush1.bf16.msra.mxu0 0
        %296 = vmatprep.subr.bf16.mxu0 0
        %297 = vmatpush1.bf16.msra.mxu0 0
        %298 = vmatprep.subr.bf16.mxu0 0
        %299 = vmatpush1.bf16.msra.mxu0 0
        %300 = vmatprep.subr.bf16.mxu0 0
        %301 = vmatpush1.bf16.msra.mxu0 0
        %302 = vmatprep.subr.bf16.mxu0 0
        %303 = vmatpush1.bf16.msra.mxu0 0
        %304 = vmatprep.subr.bf16.mxu0 0
        %305 = vmatpush1.bf16.msra.mxu0 0
        %306 = vmatprep.subr.bf16.mxu0 0
        %307 = vmatpush1.bf16.msra.mxu0 %v290
        %308 = vmatprep.subr.bf16.mxu0 0
        %309 = vmatpush2.bf16.msra.mxu0 0
        %310 = vmatprep.subr.bf16.mxu0 0
        %311 = vmatpush2.bf16.msra.mxu0 0
        %312 = vmatprep.subr.bf16.mxu0 0
        %313 = vmatpush2.bf16.msra.mxu0 0
        %314 = vmatprep.subr.bf16.mxu0 0
        %315 = vmatpush2.bf16.msra.mxu0 0
        %316 = vmatprep.subr.bf16.mxu0 0
        %317 = vmatpush2.bf16.msra.mxu0 0
        %318 = vmatprep.subr.bf16.mxu0 0
        %319 = vmatpush2.bf16.msra.mxu0 0
        %320 = vmatprep.subr.bf16.mxu0 0
        %321 = vmatpush2.bf16.msra.mxu0 0
        %322 = vmatprep.subr.bf16.mxu0 0
        %323 = vmatpush2.bf16.msra.mxu0 0
        %324 = vmatprep.mubr.bf16.mxu0 0
        %325 = vmatmul.mubr.bf16.gmra.mxu0 %v287
        %v326 = vpop.f32.mrf.mxu0
        %v327 = vadd.f32 %v281, %v326
        %v328 = vpop.f32.mrf.mxu0
        %v329 = vpop.f32.mrf.mxu0
        %v330 = vpop.f32.mrf.mxu0
        %331 = vdwg.mxu0
        %s332 = scalar_lea.vmem %s1, 8
        %v333 = vld [vmem:[%s332] sm:$0xf]
        %v334 = vld [vmem:[%s208] sm:$0xf]
        %v337 = vunpack.c.l.s4 1983009808
        %v338 = vunpack.c.0.s8 %v337
        %v339 = vlaneseq
        %v340 = vshrl.u32 %v339, 7
        %v341 = vsub.s32 %v338, %v340
        %v342 = vrot.slane %v334, %v341
        %v343 = vcombine.high %v342, %v342
        %344 = vrot.lane.b32.xlu0 %v342, 126
        %v345 = vpop.permute.xlu0 %344
        %346 = vrot.lane.b32.xlu0 %v343, 126
        %v347 = vpop.permute.xlu0 %346
        %vm348 = vcmask 1031168
        %v349 = vsel %vm348, %v345, %v347
        %v351 = vsel %vm238, %v333, 0
        %v354 = vsel %vm242, %v349, 0
        %356 = vmatprep.subr.bf16.mxu0 0
        %357 = vmatpush1.bf16.msra.mxu0 0
        %358 = vmatprep.subr.bf16.mxu0 0
        %359 = vmatpush1.bf16.msra.mxu0 0
        %360 = vmatprep.subr.bf16.mxu0 0
        %361 = vmatpush1.bf16.msra.mxu0 0
        %362 = vmatprep.subr.bf16.mxu0 0
        %363 = vmatpush1.bf16.msra.mxu0 0
        %364 = vmatprep.subr.bf16.mxu0 0
        %365 = vmatpush1.bf16.msra.mxu0 0
        %366 = vmatprep.subr.bf16.mxu0 0
        %367 = vmatpush1.bf16.msra.mxu0 0
        %368 = vmatprep.subr.bf16.mxu0 0
        %369 = vmatpush1.bf16.msra.mxu0 0
        %370 = vmatprep.subr.bf16.mxu0 0
        %371 = vmatpush1.bf16.msra.mxu0 %v354
        %372 = vmatprep.subr.bf16.mxu0 0
        %373 = vmatpush2.bf16.msra.mxu0 0
        %374 = vmatprep.subr.bf16.mxu0 0
        %375 = vmatpush2.bf16.msra.mxu0 0
        %376 = vmatprep.subr.bf16.mxu0 0
        %377 = vmatpush2.bf16.msra.mxu0 0
        %378 = vmatprep.subr.bf16.mxu0 0
        %379 = vmatpush2.bf16.msra.mxu0 0
        %380 = vmatprep.subr.bf16.mxu0 0
        %381 = vmatpush2.bf16.msra.mxu0 0
        %382 = vmatprep.subr.bf16.mxu0 0
        %383 = vmatpush2.bf16.msra.mxu0 0
        %384 = vmatprep.subr.bf16.mxu0 0
        %385 = vmatpush2.bf16.msra.mxu0 0
        %386 = vmatprep.subr.bf16.mxu0 0
        %387 = vmatpush2.bf16.msra.mxu0 0
        %388 = vmatprep.mubr.bf16.mxu0 0
        %389 = vmatmul.mubr.bf16.gmra.mxu0 %v351
        %v390 = vpop.f32.mrf.mxu0
        %v391 = vadd.f32 0.0, %v390
        %v392 = vpop.f32.mrf.mxu0
        %v393 = vpop.f32.mrf.mxu0
        %v394 = vpop.f32.mrf.mxu0
        %395 = vdwg.mxu0
        %v396 = vadd.f32 %v327, %v391
        %v397 = vlaneseq
        %v398 = vand.u32 %v397, 127
        %vm399 = vcmp.lt.s32.totalorder %v398, 16
        %v400 = vsel %vm399, %v396, 0.0
        %401 = vst [vmem:[%s191] sm:$0xff] %v400
        %402 = vadd.xlane.f32.xlu0 %v400
        %v403 = vpop.xlane.xlu0 %402
        %vm404 = vcmask 7168
        %405 = vst.msk [vmem:[%s212] sm:$0xff] %vm404, %v403
        %v406 = vmul.f32 %v400, %v400
        %407 = vadd.xlane.f32.xlu0 %v406
        %v408 = vpop.xlane.xlu0 %407
        %409 = vst.msk [vmem:[%s216] sm:$0xff] %vm404, %v408
        %s410 = sand.u32 %s74, 1
        %s411 = scalar_lea.sflag [#allocation3], %s410
        %s412 = sand.u32 %s74, 1
        %s413 = smul.addr %s412, 8
        %s414 = scalar_lea.vmem [#allocation2], %s413
        %p415 = scmp.lt.s32.totalorder %s19, 1
        %s416 = scalar_select %p415, %s19, 1
        %s417 = smul.addr %s416, 8
        %s418 = scalar_lea.vmem %s3, %s417
        %p419 = scmp.lt.s32.totalorder %s19, 1
        %s420 = scalar_select %p419, %s19, 1
        %s421 = smul.addr %s420, 8
        %s422 = scalar_lea.vmem %s4, %s421
        // Predicated region
        $region29: #{tpu_custom_call.1} parent=27 // pred_check
          %p423 = pneg %p84
        $region30: #{tpu_custom_call.1} parent=27 // pred_check_branch
          %425 = sbr.rel (%p423) target = $region32
        $region31: #{tpu_custom_call.1} parent=27 // pred_region
          %s427 = ssub.s32 128, 128
          %428 = vsyncadd %s411, %s427
          %s429 = smul.addr %s19, 128
          %s430 = scalar_lea.hbm %s2, %s429
          %s432 = sshll.u32 %s414, 4
          %s433 = int_to_ptr.vmem [resolvable:$true] %s432
          %435 = dma.vmem_to_hbm [thread:$0]  %s433, 128, %s430, %s411
        $region32: #{tpu_custom_call.1} parent=27 // pred_fallthru
          _
        // Predicated region
        $region33: #{tpu_custom_call.1} parent=27 // pred_check
          %p436 = pneg %p110
        $region34: #{tpu_custom_call.1} parent=27 // pred_check_branch
          %438 = sbr.rel (%p436) target = $region36
        $region35: #{tpu_custom_call.1} parent=27 // pred_region
          _
        $region36: #{tpu_custom_call.1} parent=27 // pred_fallthru
          _
        // Predicated region
        $region37: #{tpu_custom_call.1} parent=27 // pred_check
          %p439 = pneg %p136
        $region38: #{tpu_custom_call.1} parent=27 // pred_check_branch
          %441 = sbr.rel (%p439) target = $region40
        $region39: #{tpu_custom_call.1} parent=27 // pred_region
          _
        $region40: #{tpu_custom_call.1} parent=27 // pred_fallthru
          _
      $region28: #{tpu_custom_call.1} parent=5 // pred_fallthru
        _
      %p442 = scmp.le.s32.totalorder 2, %s14
      // Predicated region
      $region41: #{tpu_custom_call.1} parent=5 // pred_check
        %p443 = pneg %p442
      $region42: #{tpu_custom_call.1} parent=5 // pred_check_branch
        %445 = sbr.rel (%p443) target = $region44
      $region43: #{tpu_custom_call.1} parent=5 // pred_region
        %s446 = ssub.s32 %s14, 2
        // Predicated region
        $region45: #{tpu_custom_call.1} parent=43 // pred_check
          %p447 = pneg %p90
        $region46: #{tpu_custom_call.1} parent=43 // pred_check_branch
          %449 = sbr.rel (%p447) target = $region48
        $region47: #{tpu_custom_call.1} parent=43 // pred_region
          %s450 = sand.u32 %s75, 1
          %s451 = scalar_lea.sflag [#allocation3], %s450
          %s452 = sand.u32 %s75, 1
          %s453 = smul.addr %s452, 8
          %s454 = scalar_lea.vmem [#allocation2], %s453
          %455 = dma.done %s451, 128
        $region48: #{tpu_custom_call.1} parent=43 // pred_fallthru
          _
        // Predicated region
        $region49: #{tpu_custom_call.1} parent=43 // pred_check
          %p456 = pneg %p116
        $region50: #{tpu_custom_call.1} parent=43 // pred_check_branch
          %458 = sbr.rel (%p456) target = $region52
        $region51: #{tpu_custom_call.1} parent=43 // pred_region
          %p459 = scmp.lt.s32.totalorder %s20, 1
          %s460 = scalar_select %p459, %s20, 1
          %s461 = smul.addr %s460, 8
          %s462 = scalar_lea.vmem %s3, %s461
        $region52: #{tpu_custom_call.1} parent=43 // pred_fallthru
          _
        // Predicated region
        $region53: #{tpu_custom_call.1} parent=43 // pred_check
          %p463 = pneg %p142
        $region54: #{tpu_custom_call.1} parent=43 // pred_check_branch
          %465 = sbr.rel (%p463) target = $region56
        $region55: #{tpu_custom_call.1} parent=43 // pred_region
          %p466 = scmp.lt.s32.totalorder %s20, 1
          %s467 = scalar_select %p466, %s20, 1
          %s468 = smul.addr %s467, 8
          %s469 = scalar_lea.vmem %s4, %s468
        $region56: #{tpu_custom_call.1} parent=43 // pred_fallthru
          _
      $region44: #{tpu_custom_call.1} parent=5 // pred_fallthru
        _
    $region6: #{tpu_custom_call.1} parent=1 // loop_footer
      %s18 = sadd.s32 1, %s14
    $region7: #{tpu_custom_call.1} parent=1 // loop_footer_branch
      %13 = sbr.rel target = $region3
    $region8: #{tpu_custom_call.1} parent=1 // loop_exit
      _
    %470 = vsyncpa [#allocation3], 1
    %s471 = scalar_lea.sflag [#allocation3], 1
    %472 = vsyncpa %s471, 1

</llo_original>
